<compile_context>
chip_gen: v5e
topology: v5e:2x2
jax: 0.10.0
libtpu: 0.0.40
codegen_flags: <defaults>
</compile_context>

<pallas_src>
import functools

import jax
import jax.numpy as jnp
from jax.experimental import pallas as pl
from jax.experimental.pallas import tpu as pltpu

LANE = 128  # TPU lane width


def _round_up(x, m):
    return ((x + m - 1) // m) * m


def two_layer_kernel(x_ref, w1_ref, b1_ref, w2_ref, b2_ref, o_ref):
    # hidden = x @ W1 + b1   (fc1); bias broadcast (1, OUT_P) -> (TILE_B, OUT_P)
    h = jnp.dot(x_ref[...], w1_ref[...],
                preferred_element_type=jnp.float32) + b1_ref[...]
    # out = hidden @ W2 + b2 (fc2)
    o = jnp.dot(h, w2_ref[...],
                preferred_element_type=jnp.float32) + b2_ref[...]
    o_ref[...] = o.astype(o_ref.dtype)


def prepare_params(w1, b1, w2, b2):
    """One-time layout prep (NOT on the per-call hot path).

    PyTorch nn.Linear convention in:  w1 [OUT, IN], b1 [OUT],
                                      w2 [OUT, OUT], b2 [OUT].
    Out: pre-transposed, zero-padded to a 128-lane-dense layout:
         w1_p [IN, OUT_P], b1_p [1, OUT_P], w2_p [OUT_P, OUT_P], b2_p [1, OUT_P].
    Zero padding keeps the math exact: padded hidden lanes are 0 and padded
    w2 rows/cols contribute 0, so out[:, :OUT] equals the unpadded result.
    """
    out_f, in_f = w1.shape
    out_p = _round_up(out_f, LANE)
    w1_p = jnp.zeros((in_f, out_p), w1.dtype).at[:, :out_f].set(w1.T)
    b1_p = jnp.zeros((1, out_p), b1.dtype).at[0, :out_f].set(b1)
    w2_p = jnp.zeros((out_p, out_p), w2.dtype).at[:out_f, :out_f].set(w2.T)
    b2_p = jnp.zeros((1, out_p), b2.dtype).at[0, :out_f].set(b2)
    return w1_p, b1_p, w2_p, b2_p


@functools.partial(jax.jit, static_argnames=("out_features", "tile_b"))
def two_layer_forward(x, w1_p, b1_p, w2_p, b2_p, *, out_features, tile_b=512):
    """x: [B, IN] f32; padded params from prepare_params(); returns [B, OUT]."""
    B, IN = x.shape
    OUT_P = w1_p.shape[1]

    # Batch tile: multiple of 8 (sublanes), capped at tile_b; pad B to fit.
    tb = min(_round_up(tile_b, 8), _round_up(B, 8))
    B_pad = _round_up(B, tb)
    x_p = x if B_pad == B else jnp.pad(x, ((0, B_pad - B), (0, 0)))

    out = pl.pallas_call(
        two_layer_kernel,
        out_shape=jax.ShapeDtypeStruct((B_pad, OUT_P), x.dtype),
        grid=(B_pad // tb,),
        in_specs=[
            pl.BlockSpec((tb, IN), lambda i: (i, 0)),        # x tile moves
            pl.BlockSpec((IN, OUT_P), lambda i: (0, 0)),     # weights resident
            pl.BlockSpec((1, OUT_P), lambda i: (0, 0)),
            pl.BlockSpec((OUT_P, OUT_P), lambda i: (0, 0)),
            pl.BlockSpec((1, OUT_P), lambda i: (0, 0)),
        ],
        out_specs=pl.BlockSpec((tb, OUT_P), lambda i: (i, 0)),
        compiler_params=pltpu.CompilerParams(
            dimension_semantics=("parallel",)),
    )(x_p, w1_p, b1_p, w2_p, b2_p)

    return out[:B, :out_features]


def init_linear(key, out_features, in_features):
    """Deterministic init mimicking PyTorch nn.Linear default (uniform)."""
    kw, kb = jax.random.split(key)
    bound = 1.0 / jnp.sqrt(in_features)
    w = jax.random.uniform(kw, (out_features, in_features),
                           minval=-bound, maxval=bound, dtype=jnp.float32)
    b = jax.random.uniform(kb, (out_features,),
                           minval=-bound, maxval=bound, dtype=jnp.float32)
    return w, b


if __name__ == "__main__":
    key = jax.random.PRNGKey(0)
    k_x, k_fc1, k_fc2 = jax.random.split(key, 3)

    batch = 8
    input_size = 32
    output_size = 16

    x = jax.random.normal(k_x, (batch, input_size), dtype=jnp.float32)
    w1, b1 = init_linear(k_fc1, output_size, input_size)
    w2, b2 = init_linear(k_fc2, output_size, output_size)

    # One-time layout prep (outside the hot path).
    w1_p, b1_p, w2_p, b2_p = prepare_params(w1, b1, w2, b2)

    out = two_layer_forward(x, w1_p, b1_p, w2_p, b2_p,
                            out_features=output_size)
    out = jax.block_until_ready(out)

    # Reference check in plain JAX (same math as the PyTorch forward).
    ref = (x @ w1.T + b1) @ w2.T + b2
    assert out.shape == (batch, output_size)
    assert jnp.allclose(out, ref, atol=1e-5, rtol=1e-5)

    print("KERNEL_OK")
</pallas_src>

<mosaic_0001>
module attributes {stable_mosaic.version = 11 : i64} {
  func.func @two_layer_kernel(%arg0: i32, %arg1: memref<8x32xf32, #tpu.memory_space<vmem>>, %arg2: memref<32x128xf32, #tpu.memory_space<vmem>>, %arg3: memref<1x128xf32, #tpu.memory_space<vmem>>, %arg4: memref<128x128xf32, #tpu.memory_space<vmem>>, %arg5: memref<1x128xf32, #tpu.memory_space<vmem>>, %arg6: memref<8x128xf32, #tpu.memory_space<vmem>>) attributes {dimension_semantics = [#tpu.dimension_semantics<parallel>], iteration_bounds = array<i64: 1>, scalar_prefetch = 0 : i64, scratch_operands = 0 : i64, tpu.core_type = #tpu.core_type<tc>, window_params = [{transform_indices = @transform_0, window_bounds = array<i64: 8, 32>}, {pipeline_mode = #tpu.pipeline_mode<synchronous>, transform_indices = @transform_1, window_bounds = array<i64: 32, 128>}, {pipeline_mode = #tpu.pipeline_mode<synchronous>, transform_indices = @transform_2, window_bounds = array<i64: 1, 128>}, {pipeline_mode = #tpu.pipeline_mode<synchronous>, transform_indices = @transform_3, window_bounds = array<i64: 128, 128>}, {pipeline_mode = #tpu.pipeline_mode<synchronous>, transform_indices = @transform_4, window_bounds = array<i64: 1, 128>}, {transform_indices = @transform_5, window_bounds = array<i64: 8, 128>}]} {
    %c0 = arith.constant 0 : index
    %c0_0 = arith.constant 0 : index
    %0 = vector.load %arg1[%c0, %c0_0] : memref<8x32xf32, #tpu.memory_space<vmem>>, vector<8x32xf32>
    %c0_1 = arith.constant 0 : index
    %c0_2 = arith.constant 0 : index
    %1 = vector.load %arg2[%c0_1, %c0_2] : memref<32x128xf32, #tpu.memory_space<vmem>>, vector<32x128xf32>
    %cst = arith.constant dense<0.000000e+00> : vector<8x128xf32>
    %2 = tpu.matmul %0, %1, %cst {dimension_numbers = #tpu.dot_dimension_numbers<[1], [0], [0], [1], [0, 0, 1, 1], [], []>} : vector<8x32xf32>, vector<32x128xf32>, vector<8x128xf32> -> vector<8x128xf32>
    %c0_3 = arith.constant 0 : index
    %c0_4 = arith.constant 0 : index
    %3 = vector.load %arg3[%c0_3, %c0_4] : memref<1x128xf32, #tpu.memory_space<vmem>>, vector<1x128xf32>
    %4 = vector.broadcast %3 : vector<1x128xf32> to vector<8x128xf32>
    %5 = arith.addf %2, %4 : vector<8x128xf32>
    %c0_5 = arith.constant 0 : index
    %c0_6 = arith.constant 0 : index
    %6 = vector.load %arg4[%c0_5, %c0_6] : memref<128x128xf32, #tpu.memory_space<vmem>>, vector<128x128xf32>
    %cst_7 = arith.constant dense<0.000000e+00> : vector<8x128xf32>
    %7 = tpu.matmul %5, %6, %cst_7 {dimension_numbers = #tpu.dot_dimension_numbers<[1], [0], [0], [1], [0, 0, 1, 1], [], []>} : vector<8x128xf32>, vector<128x128xf32>, vector<8x128xf32> -> vector<8x128xf32>
    %c0_8 = arith.constant 0 : index
    %c0_9 = arith.constant 0 : index
    %8 = vector.load %arg5[%c0_8, %c0_9] : memref<1x128xf32, #tpu.memory_space<vmem>>, vector<1x128xf32>
    %9 = vector.broadcast %8 : vector<1x128xf32> to vector<8x128xf32>
    %10 = arith.addf %7, %9 : vector<8x128xf32>
    %c0_10 = arith.constant 0 : index
    %c0_11 = arith.constant 0 : index
    %11 = vector.load %arg6[%c0_10, %c0_11] : memref<8x128xf32, #tpu.memory_space<vmem>>, vector<8x128xf32>
    tpu.vector_store %arg6[%c0_10, %c0_11], %10 {strides = array<i32>} : memref<8x128xf32, #tpu.memory_space<vmem>>, vector<8x128xf32>,
    return
  }
  func.func @transform_0(%arg0: i32) -> (i32, i32) {
    %c0_i32 = arith.constant 0 : i32
    %c0_i32_0 = arith.constant 0 : i32
    return %arg0, %c0_i32 : i32, i32
  }
  func.func @transform_1(%arg0: i32) -> (i32, i32) {
    %c0_i32 = arith.constant 0 : i32
    %c0_i32_0 = arith.constant 0 : i32
    %c0_i32_1 = arith.constant 0 : i32
    return %c0_i32, %c0_i32_0 : i32, i32
  }
  func.func @transform_2(%arg0: i32) -> (i32, i32) {
    %c0_i32 = arith.constant 0 : i32
    %c0_i32_0 = arith.constant 0 : i32
    %c0_i32_1 = arith.constant 0 : i32
    return %c0_i32, %c0_i32_0 : i32, i32
  }
  func.func @transform_3(%arg0: i32) -> (i32, i32) {
    %c0_i32 = arith.constant 0 : i32
    %c0_i32_0 = arith.constant 0 : i32
    %c0_i32_1 = arith.constant 0 : i32
    return %c0_i32, %c0_i32_0 : i32, i32
  }
  func.func @transform_4(%arg0: i32) -> (i32, i32) {
    %c0_i32 = arith.constant 0 : i32
    %c0_i32_0 = arith.constant 0 : i32
    %c0_i32_1 = arith.constant 0 : i32
    return %c0_i32, %c0_i32_0 : i32, i32
  }
  func.func @transform_5(%arg0: i32) -> (i32, i32) {
    %c0_i32 = arith.constant 0 : i32
    %c0_i32_0 = arith.constant 0 : i32
    return %arg0, %c0_i32 : i32, i32
  }
}

</mosaic_0001>

<llo_original>
// kernel: two_layer_forward.1
$region0: #{two_layer_forward.1}
  #allocation0 [shape = 'u32[]', space=smem, size = 0x4, offset = 0x4, fixed_abs, tag = 'smem constant byte address 0x4 - core index']
  #allocation1 [shape = 'u32[72,128]{1,0:T(1,128)}', space=vmem, size = 0x9000, scoped, tag = 'internal scratch']
  %s0 = inlined_call_operand.hbm [shape: f32[8,32], index: 0, kind: input, shape index: {}]
  %s1 = inlined_call_operand.hbm [shape: f32[32,128], index: 1, kind: input, shape index: {}]
  %s2 = inlined_call_operand.vmem [shape: f32[1,128], index: 2, kind: input, shape index: {}]
  %s3 = inlined_call_operand.hbm [shape: f32[128,128], index: 3, kind: input, shape index: {}]
  %s4 = inlined_call_operand.vmem [shape: f32[1,128], index: 4, kind: input, shape index: {}]
  %s5 = inlined_call_operand.hbm [shape: f32[8,128], index: 5, kind: output, shape index: {}]
  %s6 = sld [smem:[#allocation0]]
  $region42: #{two_layer_forward.1} parent=0
    _
  %s8 = ssub.s32 1, %s6
  %s9 = scalar_select 0, %s8, %s6
  $region1: #{two_layer_forward.1} parent=0
    #allocation2 [shape = 'u8[4096]{0}', space=vmem, size = 0x1000, scoped, tag = 'input window, operand 0, single buffered']
    #allocation3 [shape = 's32[1]{0}', space=sflag, size = 0x4, scoped, tag = 'scoped memory for two_layer_forward.1']
    #allocation4 [shape = 's32[1]{0}', space=sflag, size = 0x4, scoped, tag = 'scoped memory for two_layer_forward.1']
    #allocation5 [shape = 'u8[16384]{0}', space=vmem, size = 0x4000, scoped, tag = 'input window, operand 1, single buffered']
    #allocation6 [shape = 's32[1]{0}', space=sflag, size = 0x4, scoped, tag = 'scoped memory for two_layer_forward.1']
    #allocation7 [shape = 'u8[65536]{0}', space=vmem, size = 0x10000, scoped, tag = 'input window, operand 3, single buffered']
    #allocation8 [shape = 'u8[4096]{0}', space=vmem, size = 0x1000, scoped, tag = 'output window, operand 0, single buffered']
    %10 = vsyncpa [#allocation3], 0
    %11 = vsyncpa [#allocation6], 0
    %12 = vsyncpa [#allocation4], 0
    // Predicated region
    $region2: #{two_layer_forward.1} parent=1 // pred_check
      _
    $region3: #{two_layer_forward.1} parent=1 // pred_check_branch
      %14 = sbr.rel (0) target = $region5
    $region4: #{two_layer_forward.1} parent=1 // pred_region
      %16 = vsyncadd [#allocation3], 0
      %s18 = sshll.u32 %s0, 4
      %s19 = int_to_ptr.hbm [resolvable:$true] %s18
      %s20 = sshll.u32 [#allocation2], 4
      %s21 = int_to_ptr.vmem [resolvable:$true] %s20
      %23 = dma.hbm_to_vmem [thread:$0]  %s19, 128, %s21, [#allocation3]
    $region5: #{two_layer_forward.1} parent=1 // pred_fallthru
      _
    // Predicated region
    $region6: #{two_layer_forward.1} parent=1 // pred_check
      _
    $region7: #{two_layer_forward.1} parent=1 // pred_check_branch
      %25 = sbr.rel (0) target = $region9
    $region8: #{two_layer_forward.1} parent=1 // pred_region
      %27 = vsyncadd [#allocation6], 0
      %s28 = sshll.u32 %s1, 4
      %s29 = int_to_ptr.hbm [resolvable:$true] %s28
      %s30 = sshll.u32 [#allocation5], 4
      %s31 = int_to_ptr.vmem [resolvable:$true] %s30
      %36 = dma.hbm_to_vmem [thread:$0]  %s29, 512, %s31, [#allocation6], 128, 128, 8
    $region9: #{two_layer_forward.1} parent=1 // pred_fallthru
      _
    // Predicated region
    $region10: #{two_layer_forward.1} parent=1 // pred_check
      _
    $region11: #{two_layer_forward.1} parent=1 // pred_check_branch
      %38 = sbr.rel (0) target = $region13
    $region12: #{two_layer_forward.1} parent=1 // pred_region
      _
    $region13: #{two_layer_forward.1} parent=1 // pred_fallthru
      _
    // Predicated region
    $region14: #{two_layer_forward.1} parent=1 // pred_check
      _
    $region15: #{two_layer_forward.1} parent=1 // pred_check_branch
      %40 = sbr.rel (0) target = $region17
    $region16: #{two_layer_forward.1} parent=1 // pred_region
      %42 = vsyncadd [#allocation6], 0
      %s43 = sshll.u32 %s3, 4
      %s44 = int_to_ptr.hbm [resolvable:$true] %s43
      %s45 = sshll.u32 [#allocation7], 4
      %s46 = int_to_ptr.vmem [resolvable:$true] %s45
      %51 = dma.hbm_to_vmem [thread:$0]  %s44, 2048, %s46, [#allocation6], 128, 128, 8
    $region17: #{two_layer_forward.1} parent=1 // pred_fallthru
      _
    // Predicated region
    $region18: #{two_layer_forward.1} parent=1 // pred_check
      _
    $region19: #{two_layer_forward.1} parent=1 // pred_check_branch
      %53 = sbr.rel (0) target = $region21
    $region20: #{two_layer_forward.1} parent=1 // pred_region
      _
    $region21: #{two_layer_forward.1} parent=1 // pred_fallthru
      _
    // Predicated region
    $region22: #{two_layer_forward.1} parent=1 // pred_check
      _
    $region23: #{two_layer_forward.1} parent=1 // pred_check_branch
      %55 = sbr.rel (0) target = $region25
    $region24: #{two_layer_forward.1} parent=1 // pred_region
      %57 = dma.done [#allocation3], 128
    $region25: #{two_layer_forward.1} parent=1 // pred_fallthru
      _
    // Predicated region
    $region26: #{two_layer_forward.1} parent=1 // pred_check
      _
    $region27: #{two_layer_forward.1} parent=1 // pred_check_branch
      %59 = sbr.rel (0) target = $region29
    $region28: #{two_layer_forward.1} parent=1 // pred_region
      %61 = dma.done [#allocation6], 512
    $region29: #{two_layer_forward.1} parent=1 // pred_fallthru
      _
    // Predicated region
    $region30: #{two_layer_forward.1} parent=1 // pred_check
      _
    $region31: #{two_layer_forward.1} parent=1 // pred_check_branch
      %63 = sbr.rel (0) target = $region33
    $region32: #{two_layer_forward.1} parent=1 // pred_region
      %65 = dma.done [#allocation6], 2048
    $region33: #{two_layer_forward.1} parent=1 // pred_fallthru
      _
    %v66 = vld [vmem:[#allocation2] sm:$0xff]
    %v67 = vld [vmem:[#allocation5] sm:$0xff]
    %v68 = vld [vmem:[#allocation5 + $0x8] sm:$0xff]
    %v69 = vld [vmem:[#allocation5 + $0x10] sm:$0xff]
    %v70 = vld [vmem:[#allocation5 + $0x18] sm:$0xff]
    %v71 = vld [vmem:[%s2] sm:$0x1]
    %v73 = vperm.slane %v71, 0
    %vm75 = vcmask 261120
    %v77 = vsel %vm75, %v66, 0
    %79 = vmatpush.msra.mxu0 0.0
    %80 = vmatpush.msra.mxu0 0.0
    %81 = vmatpush.msra.mxu0 0.0
    %82 = vmatpush.msra.mxu0 0.0
    %83 = vmatpush.msra.mxu0 0.0
    %84 = vmatpush.msra.mxu0 0.0
    %85 = vmatpush.msra.mxu0 0.0
    %86 = vmatpush.msra.mxu0 0.0
    %87 = vmatpush.msra.mxu0 0.0
    %88 = vmatpush.msra.mxu0 0.0
    %89 = vmatpush.msra.mxu0 0.0
    %90 = vmatpush.msra.mxu0 0.0
    %91 = vmatpush.msra.mxu0 %v70
    %92 = vmatpush.msra.mxu0 %v69
    %93 = vmatpush.msra.mxu0 %v68
    %94 = vmatpush.msra.mxu0 %v67
    %95 = vmatmul.f32.gmra.mxu0 %v77
    %v96 = vpop.f32.mrf.mxu0
    %v97 = vadd.f32 %v73, %v96
    %98 = vdwg.mxu0
    %v99 = vld [vmem:[#allocation7] sm:$0xff]
    %v100 = vld [vmem:[#allocation7 + $0x8] sm:$0xff]
    %v101 = vld [vmem:[#allocation7 + $0x10] sm:$0xff]
    %v102 = vld [vmem:[#allocation7 + $0x18] sm:$0xff]
    %v103 = vld [vmem:[#allocation7 + $0x20] sm:$0xff]
    %v104 = vld [vmem:[#allocation7 + $0x28] sm:$0xff]
    %v105 = vld [vmem:[#allocation7 + $0x30] sm:$0xff]
    %v106 = vld [vmem:[#allocation7 + $0x38] sm:$0xff]
    %v107 = vld [vmem:[#allocation7 + $0x40] sm:$0xff]
    %v108 = vld [vmem:[#allocation7 + $0x48] sm:$0xff]
    %v109 = vld [vmem:[#allocation7 + $0x50] sm:$0xff]
    %v110 = vld [vmem:[#allocation7 + $0x58] sm:$0xff]
    %v111 = vld [vmem:[#allocation7 + $0x60] sm:$0xff]
    %v112 = vld [vmem:[#allocation7 + $0x68] sm:$0xff]
    %v113 = vld [vmem:[#allocation7 + $0x70] sm:$0xff]
    %v114 = vld [vmem:[#allocation7 + $0x78] sm:$0xff]
    %v115 = vld [vmem:[%s4] sm:$0x1]
    %v117 = vperm.slane %v115, 0
    %119 = vmatpush.msra.mxu0 %v114
    %120 = vmatpush.msra.mxu0 %v113
    %121 = vmatpush.msra.mxu0 %v112
    %122 = vmatpush.msra.mxu0 %v111
    %123 = vmatpush.msra.mxu0 %v110
    %124 = vmatpush.msra.mxu0 %v109
    %125 = vmatpush.msra.mxu0 %v108
    %126 = vmatpush.msra.mxu0 %v107
    %127 = vmatpush.msra.mxu0 %v106
    %128 = vmatpush.msra.mxu0 %v105
    %129 = vmatpush.msra.mxu0 %v104
    %130 = vmatpush.msra.mxu0 %v103
    %131 = vmatpush.msra.mxu0 %v102
    %132 = vmatpush.msra.mxu0 %v101
    %133 = vmatpush.msra.mxu0 %v100
    %134 = vmatpush.msra.mxu0 %v99
    %135 = vmatmul.f32.gmra.mxu0 %v97
    %v136 = vpop.f32.mrf.mxu0
    %v137 = vadd.f32 %v117, %v136
    %138 = vdwg.mxu0
    %139 = vst [vmem:[#allocation8] sm:$0xff] %v137
    // Predicated region
    $region34: #{two_layer_forward.1} parent=1 // pred_check
      _
    $region35: #{two_layer_forward.1} parent=1 // pred_check_branch
      %141 = sbr.rel (0) target = $region37
    $region36: #{two_layer_forward.1} parent=1 // pred_region
      %143 = vsyncadd [#allocation4], 0
      %s145 = sshll.u32 [#allocation8], 4
      %s146 = int_to_ptr.vmem [resolvable:$true] %s145
      %s147 = sshll.u32 %s5, 4
      %s148 = int_to_ptr.hbm [resolvable:$true] %s147
      %150 = dma.vmem_to_hbm [thread:$0]  %s146, 128, %s148, [#allocation4]
    $region37: #{two_layer_forward.1} parent=1 // pred_fallthru
      _
    // Predicated region
    $region38: #{two_layer_forward.1} parent=1 // pred_check
      _
    $region39: #{two_layer_forward.1} parent=1 // pred_check_branch
      %152 = sbr.rel (0) target = $region41
    $region40: #{two_layer_forward.1} parent=1 // pred_region
      %154 = dma.done [#allocation4], 128
    $region41: #{two_layer_forward.1} parent=1 // pred_fallthru
      _
    %155 = vsyncpa [#allocation3], 1
    %156 = vsyncpa [#allocation6], 1
    %157 = vsyncpa [#allocation4], 1

</llo_original>
